<compile_context>
chip_gen: v5e
topology: v5e:2x2
jax: 0.10.0
libtpu: 0.0.40
codegen_flags: <defaults>
</compile_context>

<pallas_src>
import jax
import jax.numpy as jnp
from jax import lax
from jax.experimental import pallas as pl
from jax.experimental.pallas import tpu as pltpu


_ONE_HOT_MAX_CLASSES = 256


def _round_up(n, m):
    return ((n + m - 1) // m) * m


# ---------------------------------------------------------------------------
# Kernels
# ---------------------------------------------------------------------------

def _attr_kernel_onehot(x_ref, idx_ref, embp_ref, wx_ref, bf_ref, wl_ref,
                        bl_ref, o_ref):
    """Small-C path: o = relu(x@Wx + onehot(idx)@emb_proj + bf) @ Wl + bl."""
    cdt = wx_ref.dtype                                    # MXU dtype (bf16)
    tb = x_ref.shape[0]
    num_cls = embp_ref.shape[0]

    cls_iota = lax.broadcasted_iota(jnp.int32, (tb, num_cls), 1)
    onehot = (cls_iota == idx_ref[...]).astype(cdt)       # (TB, C)

    h = jnp.dot(x_ref[...].astype(cdt), wx_ref[...],      # in-kernel bf16 cast
                preferred_element_type=jnp.float32)       # (TB, Hp) f32 acc
    h = h + jnp.dot(onehot, embp_ref[...],
                    preferred_element_type=jnp.float32)
    h = h + bf_ref[...]
    h = jnp.maximum(h, 0.0)

    o_ref[...] = (jnp.dot(h.astype(cdt), wl_ref[...],
                          preferred_element_type=jnp.float32)
                  + bl_ref[...]).astype(o_ref.dtype)


def _attr_kernel_gather(cls_ref, x_ref, embp_ref, wx_ref, bf_ref, wl_ref,
                        bl_ref, o_ref, emb_rows):
    """Large-C path: row-gather emb_proj via SMEM-prefetched class indices."""
    cdt = wx_ref.dtype
    tb = x_ref.shape[0]
    num_cls = embp_ref.shape[0]
    total = cls_ref.shape[0]                               # full batch in SMEM
    base = pl.program_id(0) * tb
    n_valid = jnp.minimum(tb, total - base)                # ragged last block

    def gather_row(r, carry):
        cls = jnp.clip(cls_ref[base + r], 0, num_cls - 1)  # clamp dirty idx
        emb_rows[pl.ds(r, 1), :] = embp_ref[pl.ds(cls, 1), :]
        return carry

    lax.fori_loop(0, n_valid, gather_row, 0)

    h = jnp.dot(x_ref[...].astype(cdt), wx_ref[...],
                preferred_element_type=jnp.float32)        # (TB, Hp) f32
    h = h + emb_rows[...].astype(jnp.float32)
    h = h + bf_ref[...]
    h = jnp.maximum(h, 0.0)

    o_ref[...] = (jnp.dot(h.astype(cdt), wl_ref[...],
                          preferred_element_type=jnp.float32)
                  + bl_ref[...]).astype(o_ref.dtype)


# ---------------------------------------------------------------------------
# One-time weight preparation (split / fold / transpose / pad / cast)
# ---------------------------------------------------------------------------

def prepare_params(params, mlp_head_dim, compute_dtype=jnp.bfloat16):
    """params: emb_w (C,E), fc_w (H,D+E), fc_b (H,), logit_w (A,H), logit_b (A,).

    compute_dtype=jnp.float32 gives strict f32 parity with the PyTorch module
    (bf16 is the default for MXU throughput).
    """
    D = int(mlp_head_dim)
    fc_w = jnp.asarray(params["fc_w"], jnp.float32)        # (H, D + E)
    emb_w = jnp.asarray(params["emb_w"], jnp.float32)      # (C, E)
    logit_w = jnp.asarray(params["logit_w"], jnp.float32)  # (A, H)
    fc_b = jnp.asarray(params["fc_b"], jnp.float32)
    logit_b = jnp.asarray(params["logit_b"], jnp.float32)

    H, DE = fc_w.shape
    C, E = emb_w.shape
    A = logit_w.shape[0]
    assert DE == D + E, "fc_attr weight must match concat([x, obj_embeds], 1)"

    Hp = _round_up(H, 128)
    Ap = _round_up(A, 128)

    w_x = fc_w[:, :D].T                                    # (D, H)
    w_e = fc_w[:, D:].T                                    # (E, H)
    emb_proj = emb_w @ w_e                                  # (C, H) folded (f32)

    def pad2(a, rows, cols):
        return jnp.pad(a, ((0, rows - a.shape[0]), (0, cols - a.shape[1])))

    return {
        "w_x": pad2(w_x, D, Hp).astype(compute_dtype),            # (D, Hp)
        "emb_proj": pad2(emb_proj, C, Hp).astype(compute_dtype),  # (C, Hp)
        "b_fc": pad2(fc_b.reshape(1, H), 1, Hp),                  # (1, Hp) f32
        "w_l": pad2(logit_w.T, Hp, Ap).astype(compute_dtype),     # (Hp, Ap)
        "b_l": pad2(logit_b.reshape(1, A), 1, Ap),                # (1, Ap) f32
        "dims": (D, H, A, C, Hp, Ap),
    }


# ---------------------------------------------------------------------------
# Forward pass
# ---------------------------------------------------------------------------

def _default_block_b(batch):
    try:
        kind = jax.devices()[0].device_kind.lower()
    except Exception:  # pragma: no cover - defensive
        kind = ""
    if "v5" in kind:
        return 128                       # v5e MXU is 128x128; M=128 fills a pass
    return 512 if batch >= 1024 else 256  # v6e / v7x


def attr_fpn_predictor(x, obj_classes, prepared, *, block_b=None,
                       out_dtype=jnp.bfloat16):
    """Forward pass. `prepared` comes from prepare_params() (call once)."""
    if x.ndim == 4:
        assert x.shape[2] == 1 and x.shape[3] == 1
        x = x.reshape(x.shape[0], -1)

    D, H, A, C, Hp, Ap = prepared["dims"]
    B = x.shape[0]
    assert x.shape[1] == D
    if B == 0:                                             # empty-batch guard
        return jnp.zeros((0, A), out_dtype)

    cdt = prepared["w_x"].dtype
    if block_b is None:
        block_b = _default_block_b(B)
    block_b = max(8, _round_up(int(block_b), 8))

    # Batch tile: >= 2 grid steps once B > 64 so v7x's two TensorCores both
    # get work (harmless ~0.35us extra step on v5e/v6e).
    if B > 64:
        TB = min(block_b, _round_up(pl.cdiv(B, 2), 8))
        Bk = B                      # ragged last block handled by Pallas
    else:
        TB = _round_up(B, 8)
        Bk = TB                     # tiny batches: pad to one 8-aligned block

    idx = obj_classes.astype(jnp.int32).reshape(B)
    xk = x
    if Bk != B:                     # only for B < 64 and B % 8 != 0 (tiny copy)
        xk = jnp.pad(xk, ((0, Bk - B), (0, 0)))
        idx = jnp.pad(idx, (0, Bk - B))

    n_steps = pl.cdiv(Bk, TB)
    emb_proj = prepared["emb_proj"]
    w_x, b_fc, w_l, b_l = (prepared["w_x"], prepared["b_fc"],
                           prepared["w_l"], prepared["b_l"])

    def nbytes(a):
        return int(a.size) * a.dtype.itemsize

    use_onehot = C <= _ONE_HOT_MAX_CLASSES
    onehot_flops = 2 * Bk * C * Hp if use_onehot else 0
    cost = pl.CostEstimate(
        flops=int(2 * Bk * (D * Hp + Hp * Ap) + onehot_flops),
        transcendentals=0,
        bytes_accessed=int(nbytes(xk) + nbytes(idx) + nbytes(emb_proj)
                           + nbytes(w_x) + nbytes(b_fc) + nbytes(w_l)
                           + nbytes(b_l)
                           + Bk * Ap * jnp.dtype(out_dtype).itemsize),
    )
    cparams = pltpu.CompilerParams(dimension_semantics=("parallel",))
    out_shape = jax.ShapeDtypeStruct((Bk, Ap), out_dtype)

    if use_onehot:
        resident = lambda i: (0, 0)
        out = pl.pallas_call(
            _attr_kernel_onehot,
            out_shape=out_shape,
            grid=(n_steps,),
            in_specs=[
                pl.BlockSpec((TB, D), lambda i: (i, 0)),   # x tile (native dtype)
                pl.BlockSpec((TB, 1), lambda i: (i, 0)),   # class indices tile
                pl.BlockSpec((C, Hp), resident),           # folded embedding
                pl.BlockSpec((D, Hp), resident),           # fc_attr x-part
                pl.BlockSpec((1, Hp), resident),           # fc_attr bias (f32)
                pl.BlockSpec((Hp, Ap), resident),          # logit_attr weight
                pl.BlockSpec((1, Ap), resident),           # logit_attr bias
            ],
            out_specs=pl.BlockSpec((TB, Ap), lambda i: (i, 0)),
            compiler_params=cparams,
            cost_estimate=cost,
        )(xk, idx.reshape(Bk, 1), emb_proj, w_x, b_fc, w_l, b_l)
    else:
        resident = lambda i, cls: (0, 0)
        grid_spec = pltpu.PrefetchScalarGridSpec(
            num_scalar_prefetch=1,                         # obj_classes -> SMEM
            grid=(n_steps,),
            in_specs=[
                pl.BlockSpec((TB, D), lambda i, cls: (i, 0)),
                pl.BlockSpec((C, Hp), resident),
                pl.BlockSpec((D, Hp), resident),
                pl.BlockSpec((1, Hp), resident),
                pl.BlockSpec((Hp, Ap), resident),
                pl.BlockSpec((1, Ap), resident),
            ],
            out_specs=pl.BlockSpec((TB, Ap), lambda i, cls: (i, 0)),
            scratch_shapes=[pltpu.VMEM((TB, Hp), cdt)],    # gathered emb rows
        )
        out = pl.pallas_call(
            _attr_kernel_gather,
            out_shape=out_shape,
            grid_spec=grid_spec,
            compiler_params=cparams,
            cost_estimate=cost,
        )(idx, xk, emb_proj, w_x, b_fc, w_l, b_l)

    return out[:B, :A]


# ---------------------------------------------------------------------------
# Pure-JAX reference (mirrors the PyTorch module)
# ---------------------------------------------------------------------------

def _reference(x, obj_classes, params):
    if x.ndim == 4:
        x = x.reshape(x.shape[0], -1)
    emb = params["emb_w"][obj_classes.astype(jnp.int32)]
    cat = jnp.concatenate([x, emb], axis=1)
    h = cat @ params["fc_w"].T + params["fc_b"]
    h = jnp.maximum(h, 0.0)
    return h @ params["logit_w"].T + params["logit_b"]


def _make_params(key, num_obj, num_attr, emb_size, mlp_dim, hidden):
    k_emb, k_fc, k_logit = jax.random.split(key, 3)
    return {
        "emb_w": 0.01 * jax.random.normal(k_emb, (num_obj, emb_size), jnp.float32),
        "fc_w": 0.01 * jax.random.normal(k_fc, (hidden, mlp_dim + emb_size), jnp.float32),
        "fc_b": jnp.zeros((hidden,), jnp.float32),
        "logit_w": 0.01 * jax.random.normal(k_logit, (num_attr, hidden), jnp.float32),
        "logit_b": jnp.zeros((num_attr,), jnp.float32),
    }


if __name__ == "__main__":
    key = jax.random.PRNGKey(0)
    k1, k2, kx1, kc1, kx2, kc2 = jax.random.split(key, 6)

    # --- Test 1: small class count (one-hot path), x as (B, D, 1, 1) -------
    num_obj, num_attr, emb_size, mlp_dim, hidden, batch = 16, 24, 16, 32, 32, 8
    params1 = _make_params(k1, num_obj, num_attr, emb_size, mlp_dim, hidden)
    prepared1 = prepare_params(params1, mlp_dim)
    x1 = jax.random.normal(kx1, (batch, mlp_dim, 1, 1), jnp.float32)
    cls1 = jax.random.randint(kc1, (batch,), 0, num_obj)

    out1 = attr_fpn_predictor(x1, cls1, prepared1)
    jax.block_until_ready(out1)
    ref1 = _reference(x1, cls1, params1)
    assert out1.shape == (batch, num_attr)
    ok1 = jnp.allclose(out1.astype(jnp.float32), ref1, atol=1e-3, rtol=2e-2)
    assert ok1, f"test1 max abs err {float(jnp.max(jnp.abs(out1.astype(jnp.float32) - ref1)))}"

    # --- Test 2: large class count (SMEM-prefetch gather path), 2-step grid
    # with a ragged (partial) last batch block ------------------------------
    num_obj2, num_attr2, emb_size2, mlp_dim2, hidden2, batch2 = 300, 30, 16, 64, 40, 200
    params2 = _make_params(k2, num_obj2, num_attr2, emb_size2, mlp_dim2, hidden2)
    prepared2 = prepare_params(params2, mlp_dim2)
    x2 = jax.random.normal(kx2, (batch2, mlp_dim2), jnp.float32)
    cls2 = jax.random.randint(kc2, (batch2,), 0, num_obj2)

    out2 = attr_fpn_predictor(x2, cls2, prepared2)
    jax.block_until_ready(out2)
    ref2 = _reference(x2, cls2, params2)
    assert out2.shape == (batch2, num_attr2)
    ok2 = jnp.allclose(out2.astype(jnp.float32), ref2, atol=1e-3, rtol=2e-2)
    assert ok2, f"test2 max abs err {float(jnp.max(jnp.abs(out2.astype(jnp.float32) - ref2)))}"

    print("KERNEL_OK")
</pallas_src>

<mosaic_0001>
module attributes {stable_mosaic.version = 11 : i64} {
  func.func @_attr_kernel_onehot(%arg0: i32, %arg1: memref<8x32xf32, #tpu.memory_space<vmem>>, %arg2: memref<8x1xi32, #tpu.memory_space<vmem>>, %arg3: memref<16x128xbf16, #tpu.memory_space<vmem>>, %arg4: memref<32x128xbf16, #tpu.memory_space<vmem>>, %arg5: memref<1x128xf32, #tpu.memory_space<vmem>>, %arg6: memref<128x128xbf16, #tpu.memory_space<vmem>>, %arg7: memref<1x128xf32, #tpu.memory_space<vmem>>, %arg8: memref<8x128xbf16, #tpu.memory_space<vmem>>) attributes {dimension_semantics = [#tpu.dimension_semantics<parallel>], iteration_bounds = array<i64: 1>, scalar_prefetch = 0 : i64, scratch_operands = 0 : i64, tpu.core_type = #tpu.core_type<tc>, window_params = [{transform_indices = @transform_0, window_bounds = array<i64: 8, 32>}, {transform_indices = @transform_1, window_bounds = array<i64: 8, 1>}, {pipeline_mode = #tpu.pipeline_mode<synchronous>, transform_indices = @transform_2, window_bounds = array<i64: 16, 128>}, {pipeline_mode = #tpu.pipeline_mode<synchronous>, transform_indices = @transform_3, window_bounds = array<i64: 32, 128>}, {pipeline_mode = #tpu.pipeline_mode<synchronous>, transform_indices = @transform_4, window_bounds = array<i64: 1, 128>}, {pipeline_mode = #tpu.pipeline_mode<synchronous>, transform_indices = @transform_5, window_bounds = array<i64: 128, 128>}, {pipeline_mode = #tpu.pipeline_mode<synchronous>, transform_indices = @transform_6, window_bounds = array<i64: 1, 128>}, {transform_indices = @transform_7, window_bounds = array<i64: 8, 128>}]} {
    %0 = tpu.iota {dimensions = array<i32: 1>} : vector<8x16xi32>
    %c0 = arith.constant 0 : index
    %c0_0 = arith.constant 0 : index
    %1 = vector.load %arg2[%c0, %c0_0] : memref<8x1xi32, #tpu.memory_space<vmem>>, vector<8x1xi32>
    %2 = vector.broadcast %1 : vector<8x1xi32> to vector<8x16xi32>
    %3 = arith.cmpi eq, %0, %2 : vector<8x16xi32>
    %4 = arith.extui %3 : vector<8x16xi1> to vector<8x16xi32>
    %5 = arith.sitofp %4 : vector<8x16xi32> to vector<8x16xf32>
    %6 = arith.truncf %5 : vector<8x16xf32> to vector<8x16xbf16>
    %c0_1 = arith.constant 0 : index
    %c0_2 = arith.constant 0 : index
    %7 = vector.load %arg1[%c0_1, %c0_2] : memref<8x32xf32, #tpu.memory_space<vmem>>, vector<8x32xf32>
    %8 = arith.truncf %7 : vector<8x32xf32> to vector<8x32xbf16>
    %c0_3 = arith.constant 0 : index
    %c0_4 = arith.constant 0 : index
    %9 = vector.load %arg4[%c0_3, %c0_4] : memref<32x128xbf16, #tpu.memory_space<vmem>>, vector<32x128xbf16>
    %cst = arith.constant dense<0.000000e+00> : vector<8x128xf32>
    %10 = tpu.matmul %8, %9, %cst {dimension_numbers = #tpu.dot_dimension_numbers<[1], [0], [0], [1], [0, 0, 1, 1], [], []>} : vector<8x32xbf16>, vector<32x128xbf16>, vector<8x128xf32> -> vector<8x128xf32>
    %c0_5 = arith.constant 0 : index
    %c0_6 = arith.constant 0 : index
    %11 = vector.load %arg3[%c0_5, %c0_6] : memref<16x128xbf16, #tpu.memory_space<vmem>>, vector<16x128xbf16>
    %cst_7 = arith.constant dense<0.000000e+00> : vector<8x128xf32>
    %12 = tpu.matmul %6, %11, %cst_7 {dimension_numbers = #tpu.dot_dimension_numbers<[1], [0], [0], [1], [0, 0, 1, 1], [], []>} : vector<8x16xbf16>, vector<16x128xbf16>, vector<8x128xf32> -> vector<8x128xf32>
    %13 = arith.addf %10, %12 : vector<8x128xf32>
    %c0_8 = arith.constant 0 : index
    %c0_9 = arith.constant 0 : index
    %14 = vector.load %arg5[%c0_8, %c0_9] : memref<1x128xf32, #tpu.memory_space<vmem>>, vector<1x128xf32>
    %15 = vector.broadcast %14 : vector<1x128xf32> to vector<8x128xf32>
    %16 = arith.addf %13, %15 : vector<8x128xf32>
    %cst_10 = arith.constant 0.000000e+00 : f32
    %17 = vector.broadcast %cst_10 : f32 to vector<8x128xf32>
    %18 = arith.maximumf %16, %17 : vector<8x128xf32>
    %19 = arith.truncf %18 : vector<8x128xf32> to vector<8x128xbf16>
    %c0_11 = arith.constant 0 : index
    %c0_12 = arith.constant 0 : index
    %20 = vector.load %arg6[%c0_11, %c0_12] : memref<128x128xbf16, #tpu.memory_space<vmem>>, vector<128x128xbf16>
    %cst_13 = arith.constant dense<0.000000e+00> : vector<8x128xf32>
    %21 = tpu.matmul %19, %20, %cst_13 {dimension_numbers = #tpu.dot_dimension_numbers<[1], [0], [0], [1], [0, 0, 1, 1], [], []>} : vector<8x128xbf16>, vector<128x128xbf16>, vector<8x128xf32> -> vector<8x128xf32>
    %c0_14 = arith.constant 0 : index
    %c0_15 = arith.constant 0 : index
    %22 = vector.load %arg7[%c0_14, %c0_15] : memref<1x128xf32, #tpu.memory_space<vmem>>, vector<1x128xf32>
    %23 = vector.broadcast %22 : vector<1x128xf32> to vector<8x128xf32>
    %24 = arith.addf %21, %23 : vector<8x128xf32>
    %25 = arith.truncf %24 : vector<8x128xf32> to vector<8x128xbf16>
    %c0_16 = arith.constant 0 : index
    %c0_17 = arith.constant 0 : index
    %26 = vector.load %arg8[%c0_16, %c0_17] : memref<8x128xbf16, #tpu.memory_space<vmem>>, vector<8x128xbf16>
    tpu.vector_store %arg8[%c0_16, %c0_17], %25 {strides = array<i32>} : memref<8x128xbf16, #tpu.memory_space<vmem>>, vector<8x128xbf16>,
    return
  }
  func.func @transform_0(%arg0: i32) -> (i32, i32) {
    %c0_i32 = arith.constant 0 : i32
    %c0_i32_0 = arith.constant 0 : i32
    return %arg0, %c0_i32 : i32, i32
  }
  func.func @transform_1(%arg0: i32) -> (i32, i32) {
    %c0_i32 = arith.constant 0 : i32
    %c0_i32_0 = arith.constant 0 : i32
    return %arg0, %c0_i32 : i32, i32
  }
  func.func @transform_2(%arg0: i32) -> (i32, i32) {
    %c0_i32 = arith.constant 0 : i32
    %c0_i32_0 = arith.constant 0 : i32
    %c0_i32_1 = arith.constant 0 : i32
    return %c0_i32, %c0_i32_0 : i32, i32
  }
  func.func @transform_3(%arg0: i32) -> (i32, i32) {
    %c0_i32 = arith.constant 0 : i32
    %c0_i32_0 = arith.constant 0 : i32
    %c0_i32_1 = arith.constant 0 : i32
    return %c0_i32, %c0_i32_0 : i32, i32
  }
  func.func @transform_4(%arg0: i32) -> (i32, i32) {
    %c0_i32 = arith.constant 0 : i32
    %c0_i32_0 = arith.constant 0 : i32
    %c0_i32_1 = arith.constant 0 : i32
    return %c0_i32, %c0_i32_0 : i32, i32
  }
  func.func @transform_5(%arg0: i32) -> (i32, i32) {
    %c0_i32 = arith.constant 0 : i32
    %c0_i32_0 = arith.constant 0 : i32
    %c0_i32_1 = arith.constant 0 : i32
    return %c0_i32, %c0_i32_0 : i32, i32
  }
  func.func @transform_6(%arg0: i32) -> (i32, i32) {
    %c0_i32 = arith.constant 0 : i32
    %c0_i32_0 = arith.constant 0 : i32
    %c0_i32_1 = arith.constant 0 : i32
    return %c0_i32, %c0_i32_0 : i32, i32
  }
  func.func @transform_7(%arg0: i32) -> (i32, i32) {
    %c0_i32 = arith.constant 0 : i32
    %c0_i32_0 = arith.constant 0 : i32
    return %arg0, %c0_i32 : i32, i32
  }
}

</mosaic_0001>

<llo_original>
// kernel: tpu_custom_call.1
$region0: #{tpu_custom_call.1}
  #allocation0 [shape = 'u32[]', space=smem, size = 0x4, offset = 0x4, fixed_abs, tag = 'smem constant byte address 0x4 - core index']
  #allocation1 [shape = 'u32[72,128]{1,0:T(1,128)}', space=vmem, size = 0x9000, scoped, tag = 'internal scratch']
  %s0 = inlined_call_operand.vmem [shape: f32[8,32], index: 0, kind: input, shape index: {}]
  %s1 = inlined_call_operand.vmem [shape: s32[8,1], index: 1, kind: input, shape index: {}]
  %s2 = inlined_call_operand.hbm [shape: bf16[16,128], index: 2, kind: input, shape index: {}]
  %s3 = inlined_call_operand.hbm [shape: bf16[32,128], index: 3, kind: input, shape index: {}]
  %s4 = inlined_call_operand.vmem [shape: f32[1,128], index: 4, kind: input, shape index: {}]
  %s5 = inlined_call_operand.hbm [shape: bf16[128,128], index: 5, kind: input, shape index: {}]
  %s6 = inlined_call_operand.vmem [shape: f32[1,128], index: 6, kind: input, shape index: {}]
  %s7 = inlined_call_operand.hbm [shape: bf16[8,128], index: 7, kind: output, shape index: {}]
  %s8 = sld [smem:[#allocation0]]
  $region50: #{tpu_custom_call.1} parent=0
    _
  %s10 = ssub.s32 1, %s8
  %s11 = scalar_select 0, %s10, %s8
  $region1: #{tpu_custom_call.1} parent=0
    #allocation2 [shape = 'u8[4096]{0}', space=vmem, size = 0x1000, scoped, tag = 'input window, operand 2, single buffered']
    #allocation3 [shape = 's32[1]{0}', space=sflag, size = 0x4, scoped, tag = 'scoped memory for tpu_custom_call.1']
    #allocation4 [shape = 's32[1]{0}', space=sflag, size = 0x4, scoped, tag = 'scoped memory for tpu_custom_call.1']
    #allocation5 [shape = 'u8[8192]{0}', space=vmem, size = 0x2000, scoped, tag = 'input window, operand 3, single buffered']
    #allocation6 [shape = 's32[1]{0}', space=sflag, size = 0x4, scoped, tag = 'scoped memory for tpu_custom_call.1']
    #allocation7 [shape = 'u8[32768]{0}', space=vmem, size = 0x8000, scoped, tag = 'input window, operand 5, single buffered']
    #allocation8 [shape = 'u8[2048]{0}', space=vmem, size = 0x800, scoped, tag = 'output window, operand 0, single buffered']
    %12 = vsyncpa [#allocation3], 0
    %13 = vsyncpa [#allocation6], 0
    %14 = vsyncpa [#allocation4], 0
    // Predicated region
    $region2: #{tpu_custom_call.1} parent=1 // pred_check
      _
    $region3: #{tpu_custom_call.1} parent=1 // pred_check_branch
      %16 = sbr.rel (0) target = $region5
    $region4: #{tpu_custom_call.1} parent=1 // pred_region
      _
    $region5: #{tpu_custom_call.1} parent=1 // pred_fallthru
      _
    // Predicated region
    $region6: #{tpu_custom_call.1} parent=1 // pred_check
      _
    $region7: #{tpu_custom_call.1} parent=1 // pred_check_branch
      %18 = sbr.rel (0) target = $region9
    $region8: #{tpu_custom_call.1} parent=1 // pred_region
      _
    $region9: #{tpu_custom_call.1} parent=1 // pred_fallthru
      _
    // Predicated region
    $region10: #{tpu_custom_call.1} parent=1 // pred_check
      _
    $region11: #{tpu_custom_call.1} parent=1 // pred_check_branch
      %20 = sbr.rel (0) target = $region13
    $region12: #{tpu_custom_call.1} parent=1 // pred_region
      %22 = vsyncadd [#allocation3], 0
      %s23 = sshll.u32 %s2, 4
      %s24 = int_to_ptr.hbm [resolvable:$true] %s23
      %s25 = sshll.u32 [#allocation2], 4
      %s26 = int_to_ptr.vmem [resolvable:$true] %s25
      %31 = dma.hbm_to_vmem [thread:$0]  %s24, 128, %s26, [#allocation3], 64, 64, 4
    $region13: #{tpu_custom_call.1} parent=1 // pred_fallthru
      _
    // Predicated region
    $region14: #{tpu_custom_call.1} parent=1 // pred_check
      _
    $region15: #{tpu_custom_call.1} parent=1 // pred_check_branch
      %33 = sbr.rel (0) target = $region17
    $region16: #{tpu_custom_call.1} parent=1 // pred_region
      %35 = vsyncadd [#allocation6], 0
      %s36 = sshll.u32 %s3, 4
      %s37 = int_to_ptr.hbm [resolvable:$true] %s36
      %s38 = sshll.u32 [#allocation5], 4
      %s39 = int_to_ptr.vmem [resolvable:$true] %s38
      %44 = dma.hbm_to_vmem [thread:$0]  %s37, 256, %s39, [#allocation6], 64, 64, 4
    $region17: #{tpu_custom_call.1} parent=1 // pred_fallthru
      _
    // Predicated region
    $region18: #{tpu_custom_call.1} parent=1 // pred_check
      _
    $region19: #{tpu_custom_call.1} parent=1 // pred_check_branch
      %46 = sbr.rel (0) target = $region21
    $region20: #{tpu_custom_call.1} parent=1 // pred_region
      _
    $region21: #{tpu_custom_call.1} parent=1 // pred_fallthru
      _
    // Predicated region
    $region22: #{tpu_custom_call.1} parent=1 // pred_check
      _
    $region23: #{tpu_custom_call.1} parent=1 // pred_check_branch
      %48 = sbr.rel (0) target = $region25
    $region24: #{tpu_custom_call.1} parent=1 // pred_region
      %50 = vsyncadd [#allocation6], 0
      %s51 = sshll.u32 %s5, 4
      %s52 = int_to_ptr.hbm [resolvable:$true] %s51
      %s53 = sshll.u32 [#allocation7], 4
      %s54 = int_to_ptr.vmem [resolvable:$true] %s53
      %59 = dma.hbm_to_vmem [thread:$0]  %s52, 1024, %s54, [#allocation6], 64, 64, 4
    $region25: #{tpu_custom_call.1} parent=1 // pred_fallthru
      _
    // Predicated region
    $region26: #{tpu_custom_call.1} parent=1 // pred_check
      _
    $region27: #{tpu_custom_call.1} parent=1 // pred_check_branch
      %61 = sbr.rel (0) target = $region29
    $region28: #{tpu_custom_call.1} parent=1 // pred_region
      _
    $region29: #{tpu_custom_call.1} parent=1 // pred_fallthru
      _
    // Predicated region
    $region30: #{tpu_custom_call.1} parent=1 // pred_check
      _
    $region31: #{tpu_custom_call.1} parent=1 // pred_check_branch
      %63 = sbr.rel (0) target = $region33
    $region32: #{tpu_custom_call.1} parent=1 // pred_region
      %65 = dma.done [#allocation3], 128
    $region33: #{tpu_custom_call.1} parent=1 // pred_fallthru
      _
    // Predicated region
    $region34: #{tpu_custom_call.1} parent=1 // pred_check
      _
    $region35: #{tpu_custom_call.1} parent=1 // pred_check_branch
      %67 = sbr.rel (0) target = $region37
    $region36: #{tpu_custom_call.1} parent=1 // pred_region
      %69 = dma.done [#allocation6], 256
    $region37: #{tpu_custom_call.1} parent=1 // pred_fallthru
      _
    // Predicated region
    $region38: #{tpu_custom_call.1} parent=1 // pred_check
      _
    $region39: #{tpu_custom_call.1} parent=1 // pred_check_branch
      %71 = sbr.rel (0) target = $region41
    $region40: #{tpu_custom_call.1} parent=1 // pred_region
      %73 = dma.done [#allocation6], 1024
    $region41: #{tpu_custom_call.1} parent=1 // pred_fallthru
      _
    %v75 = vlaneseq
    %v76 = vand.u32 %v75, 127
    %v77 = vld [vmem:[%s1] sm:$0xff]
    %78 = vset.pattern.permute.xlu0 0
    %79 = vperm.xlu0 %78, %v77
    %v80 = vpop.permute.xlu0 %79
    %vm81 = vcmp.eq.s32.totalorder %v76, %v80
    %v82 = vsel %vm81, 1, 0
    %v83 = vcvt.s32.f32 %v82
    %v84 = vpack.c.bf16 %v83, %v83
    %v85 = vld [vmem:[%s0] sm:$0xff]
    %v86 = vpack.c.bf16 %v85, %v85
    %v87 = vld [vmem:[#allocation5] sm:$0xf]
    %v88 = vld [vmem:[#allocation5 + $0x4] sm:$0xf]
    %v89 = vld [vmem:[#allocation5 + $0x8] sm:$0xf]
    %v90 = vld [vmem:[#allocation5 + $0xc] sm:$0xf]
    %v91 = vld [vmem:[#allocation2] sm:$0xf]
    %v92 = vld [vmem:[#allocation2 + $0x4] sm:$0xf]
    %v95 = vunpack.c.l.b16 %v91
    %v96 = vunpack.c.l.b16 %v92
    %v97 = vpack.c.b16 %v96, %v95
    %vm99 = vcmask 130048
    %v101 = vsel %vm99, %v84, 0
    %103 = vmatpush.bf16.msra.mxu0 0
    %104 = vmatpush.bf16.msra.mxu0 0
    %105 = vmatpush.bf16.msra.mxu0 0
    %106 = vmatpush.bf16.msra.mxu0 0
    %107 = vmatpush.bf16.msra.mxu0 0
    %108 = vmatpush.bf16.msra.mxu0 0
    %109 = vmatpush.bf16.msra.mxu0 0
    %110 = vmatpush.bf16.msra.mxu0 %v97
    %111 = vmatmul.bf16.gmra.mxu0 %v101
    %v112 = vpop.f32.mrf.mxu0
    %v113 = vadd.f32 0.0, %v112
    %v114 = vpop.f32.mrf.mxu0
    %115 = vdwg.mxu0
    %v120 = vunpack.c.l.b16 %v87
    %v121 = vunpack.c.l.b16 %v88
    %v122 = vunpack.c.l.b16 %v89
    %v123 = vunpack.c.l.b16 %v90
    %v124 = vpack.c.b16 %v121, %v120
    %v125 = vpack.c.b16 %v123, %v122
    %vm128 = vcmask 261120
    %v130 = vsel %vm128, %v86, 0
    %132 = vmatpush.bf16.msra.mxu0 0
    %133 = vmatpush.bf16.msra.mxu0 0
    %134 = vmatpush.bf16.msra.mxu0 0
    %135 = vmatpush.bf16.msra.mxu0 0
    %136 = vmatpush.bf16.msra.mxu0 0
    %137 = vmatpush.bf16.msra.mxu0 0
    %138 = vmatpush.bf16.msra.mxu0 %v125
    %139 = vmatpush.bf16.msra.mxu0 %v124
    %140 = vmatmul.bf16.gmra.mxu0 %v130
    %v141 = vpop.f32.mrf.mxu0
    %v142 = vadd.f32 %v113, %v141
    %v143 = vpop.f32.mrf.mxu0
    %144 = vdwg.mxu0
    %v145 = vld [vmem:[%s4] sm:$0x1]
    %v147 = vperm.slane %v145, 0
    %v149 = vadd.f32 %v142, %v147
    %v150 = vmax.f32 %v149, 0.0
    %v151 = vpack.c.bf16 %v150, %v150
    %v152 = vld [vmem:[#allocation7] sm:$0xf]
    %v153 = vld [vmem:[#allocation7 + $0x4] sm:$0xf]
    %v154 = vld [vmem:[#allocation7 + $0x8] sm:$0xf]
    %v155 = vld [vmem:[#allocation7 + $0xc] sm:$0xf]
    %v156 = vld [vmem:[#allocation7 + $0x10] sm:$0xf]
    %v157 = vld [vmem:[#allocation7 + $0x14] sm:$0xf]
    %v158 = vld [vmem:[#allocation7 + $0x18] sm:$0xf]
    %v159 = vld [vmem:[#allocation7 + $0x1c] sm:$0xf]
    %v160 = vld [vmem:[#allocation7 + $0x20] sm:$0xf]
    %v161 = vld [vmem:[#allocation7 + $0x24] sm:$0xf]
    %v162 = vld [vmem:[#allocation7 + $0x28] sm:$0xf]
    %v163 = vld [vmem:[#allocation7 + $0x2c] sm:$0xf]
    %v164 = vld [vmem:[#allocation7 + $0x30] sm:$0xf]
    %v165 = vld [vmem:[#allocation7 + $0x34] sm:$0xf]
    %v166 = vld [vmem:[#allocation7 + $0x38] sm:$0xf]
    %v167 = vld [vmem:[#allocation7 + $0x3c] sm:$0xf]
    %v168 = vld [vmem:[%s6] sm:$0x1]
    %v170 = vperm.slane %v168, 0
    %v188 = vunpack.c.l.b16 %v152
    %v189 = vunpack.c.l.b16 %v153
    %v190 = vunpack.c.l.b16 %v154
    %v191 = vunpack.c.l.b16 %v155
    %v192 = vunpack.c.l.b16 %v156
    %v193 = vunpack.c.l.b16 %v157
    %v194 = vunpack.c.l.b16 %v158
    %v195 = vunpack.c.l.b16 %v159
    %v196 = vunpack.c.l.b16 %v160
    %v197 = vunpack.c.l.b16 %v161
    %v198 = vunpack.c.l.b16 %v162
    %v199 = vunpack.c.l.b16 %v163
    %v200 = vunpack.c.l.b16 %v164
    %v201 = vunpack.c.l.b16 %v165
    %v202 = vunpack.c.l.b16 %v166
    %v203 = vunpack.c.l.b16 %v167
    %v204 = vpack.c.b16 %v189, %v188
    %v205 = vpack.c.b16 %v191, %v190
    %v206 = vpack.c.b16 %v193, %v192
    %v207 = vpack.c.b16 %v195, %v194
    %v208 = vpack.c.b16 %v197, %v196
    %v209 = vpack.c.b16 %v199, %v198
    %v210 = vpack.c.b16 %v201, %v200
    %v211 = vpack.c.b16 %v203, %v202
    %220 = vmatpush.bf16.msra.mxu0 %v211
    %221 = vmatpush.bf16.msra.mxu0 %v210
    %222 = vmatpush.bf16.msra.mxu0 %v209
    %223 = vmatpush.bf16.msra.mxu0 %v208
    %224 = vmatpush.bf16.msra.mxu0 %v207
    %225 = vmatpush.bf16.msra.mxu0 %v206
    %226 = vmatpush.bf16.msra.mxu0 %v205
    %227 = vmatpush.bf16.msra.mxu0 %v204
    %228 = vmatmul.bf16.gmra.mxu0 %v151
    %v229 = vpop.f32.mrf.mxu0
    %v230 = vadd.f32 %v170, %v229
    %v231 = vpop.f32.mrf.mxu0
    %232 = vdwg.mxu0
    %v233 = vpack.c.bf16 %v230, %v230
    %234 = vst [vmem:[#allocation8] sm:$0xf] %v233
    // Predicated region
    $region42: #{tpu_custom_call.1} parent=1 // pred_check
      _
    $region43: #{tpu_custom_call.1} parent=1 // pred_check_branch
      %236 = sbr.rel (0) target = $region45
    $region44: #{tpu_custom_call.1} parent=1 // pred_region
      %238 = vsyncadd [#allocation4], 0
      %s240 = sshll.u32 [#allocation8], 4
      %s241 = int_to_ptr.vmem [resolvable:$true] %s240
      %s242 = sshll.u32 %s7, 4
      %s243 = int_to_ptr.hbm [resolvable:$true] %s242
      %245 = dma.vmem_to_hbm [thread:$0]  %s241, 64, %s243, [#allocation4]
    $region45: #{tpu_custom_call.1} parent=1 // pred_fallthru
      _
    // Predicated region
    $region46: #{tpu_custom_call.1} parent=1 // pred_check
      _
    $region47: #{tpu_custom_call.1} parent=1 // pred_check_branch
      %247 = sbr.rel (0) target = $region49
    $region48: #{tpu_custom_call.1} parent=1 // pred_region
      %249 = dma.done [#allocation4], 64
    $region49: #{tpu_custom_call.1} parent=1 // pred_fallthru
      _
    %250 = vsyncpa [#allocation3], 1
    %251 = vsyncpa [#allocation6], 1
    %252 = vsyncpa [#allocation4], 1

</llo_original>
